<compile_context>
chip_gen: v7x
topology: tpu7x:2x2x1
jax: 0.10.0
libtpu: 0.0.40
codegen_flags: <defaults>
</compile_context>

<pallas_src>
import math
import functools

import jax
import jax.numpy as jnp
from jax.experimental import pallas as pl
from jax.experimental.pallas import tpu as pltpu


def make_pos_embedding(emb_size: int, maxlen: int = 5000) -> jnp.ndarray:
    """Deterministic sinusoidal buffer, identical to the PyTorch __init__."""
    den = jnp.exp(-jnp.arange(0, emb_size, 2, dtype=jnp.float32)
                  * (math.log(10000.0) / emb_size))
    pos = jnp.arange(0, maxlen, dtype=jnp.float32).reshape(maxlen, 1)
    pe = jnp.zeros((maxlen, emb_size), dtype=jnp.float32)
    pe = pe.at[:, 0::2].set(jnp.sin(pos * den))
    pe = pe.at[:, 1::2].set(jnp.cos(pos * den))
    return pe[:, None, :]  # (maxlen, 1, E)


def _hash_u32(x):
    # "lowbias32" finalizer: plain 32-bit VPU integer ops only (no TPU-specific
    # PRNG primitives), so it lowers on Mosaic and runs under interpret mode.
    x = x ^ (x >> 16)
    x = x * jnp.uint32(0x7FEB352D)
    x = x ^ (x >> 15)
    x = x * jnp.uint32(0x846CA68B)
    x = x ^ (x >> 16)
    return x


def _pos_emb_kernel(seed_ref, tgt_ref, pos_ref, out_ref, *, scale, dropout_p):
    # tgt_ref: (ts, B, E) native dtype; pos_ref: (ts, 1, E) f32 -> broadcast over B.
    x = tgt_ref[...].astype(jnp.float32) * jnp.float32(scale) + pos_ref[...]

    if dropout_p > 0.0:
        ts, B, E = x.shape
        # Absolute element index -> dropout mask independent of seq tiling.
        r = jax.lax.broadcasted_iota(jnp.int32, (ts, B, E), 0).astype(jnp.uint32)
        b = jax.lax.broadcasted_iota(jnp.int32, (ts, B, E), 1).astype(jnp.uint32)
        e = jax.lax.broadcasted_iota(jnp.int32, (ts, B, E), 2).astype(jnp.uint32)
        s_abs = r + (pl.program_id(0) * ts).astype(jnp.uint32)
        idx = (s_abs * jnp.uint32(B) + b) * jnp.uint32(E) + e
        seed_mix = seed_ref[0].astype(jnp.uint32) * jnp.uint32(0x9E3779B9)
        bits = _hash_u32(idx + seed_mix)
        # Integer-threshold compare directly on the uint32 bits.
        thr = jnp.uint32(min(int(round(dropout_p * 2.0 ** 32)), 2 ** 32 - 1))
        keep = bits >= thr  # P(keep) ~ 1 - dropout_p
        x = x * jnp.where(keep, jnp.float32(1.0 / (1.0 - dropout_p)),
                          jnp.float32(0.0))

    out_ref[...] = x.astype(out_ref.dtype)


def _choose_seq_tile(S, B, E, itemsize, target_bytes=1 << 20):
    """Largest divisor of S whose (tile, B, E) block is <= ~target_bytes."""
    per_row = max(1, B * E * itemsize)
    cap = max(1, min(S, target_bytes // per_row))
    for d in range(int(cap), 0, -1):
        if S % d == 0:
            return d
    return 1


def positional_embedding_target(tgt, pos_embedding, *, dropout_p=0.0, seed=0,
                                seq_tile=None):
    """tgt: (S, B, E). pos_embedding: (maxlen, 1, E) f32. Output dtype == tgt dtype."""
    S, B, E = tgt.shape
    assert pos_embedding.shape[0] >= S and pos_embedding.shape[2] == E
    if seq_tile is None:
        seq_tile = _choose_seq_tile(S, B, E, jnp.dtype(tgt.dtype).itemsize)
    assert S % seq_tile == 0, "seq length must be divisible by the seq tile"
    scale = math.sqrt(E)
    seed_arr = jnp.array([seed], dtype=jnp.int32)

    kernel = functools.partial(_pos_emb_kernel, scale=scale,
                               dropout_p=float(dropout_p))

    return pl.pallas_call(
        kernel,
        out_shape=jax.ShapeDtypeStruct((S, B, E), tgt.dtype),
        grid_spec=pltpu.PrefetchScalarGridSpec(
            num_scalar_prefetch=1,                 # seed lives in SMEM
            grid=(S // seq_tile,),
            in_specs=[
                # last two block dims equal the full array dims -> allowed
                pl.BlockSpec((seq_tile, B, E), lambda i, seed: (i, 0, 0)),
                pl.BlockSpec((seq_tile, 1, E), lambda i, seed: (i, 0, 0)),
            ],
            out_specs=pl.BlockSpec((seq_tile, B, E), lambda i, seed: (i, 0, 0)),
        ),
        compiler_params=pltpu.CompilerParams(
            dimension_semantics=("parallel",),     # seq tiles are independent
            vmem_limit_bytes=32 * 1024 * 1024),
    )(seed_arr, tgt, pos_embedding.astype(jnp.float32))


if __name__ == "__main__":
    # Small shapes consistent with the module's forward: (seq, batch, emb_size).
    S, B, E = 8, 2, 32
    MAXLEN = 64
    DROPOUT = 0.1

    key = jax.random.PRNGKey(0)
    tgt = jax.random.normal(key, (S, B, E), dtype=jnp.float32)
    pos_embedding = make_pos_embedding(E, MAXLEN)

    ref = tgt * math.sqrt(E) + pos_embedding[:S]

    # 1) Eval-mode path (dropout is identity) -- verify against pure-JAX reference.
    out_eval = jax.block_until_ready(
        positional_embedding_target(tgt, pos_embedding, dropout_p=0.0))
    assert out_eval.shape == (S, B, E) and out_eval.dtype == tgt.dtype
    assert jnp.allclose(out_eval, ref, atol=1e-5, rtol=1e-5), "mismatch vs reference"

    # 2) Train-mode path: inverted dropout, every element is 0 or ref/(1-p).
    # TODO(synk): PyTorch's dropout RNG stream cannot be reproduced bit-exactly;
    # the kernel uses a deterministic counter-based hash of the element index.
    out_train = jax.block_until_ready(
        positional_embedding_target(tgt, pos_embedding, dropout_p=DROPOUT,
                                    seed=1234))
    inv = 1.0 / (1.0 - DROPOUT)
    ok = jnp.isclose(out_train, 0.0) | jnp.isclose(out_train, ref * inv,
                                                   atol=1e-4, rtol=1e-4)
    assert bool(jnp.all(ok))
    assert out_train.shape == (S, B, E) and out_train.dtype == tgt.dtype

    print("KERNEL_OK")
</pallas_src>

<mosaic_0001>
module attributes {stable_mosaic.version = 11 : i64} {
  func.func @_pos_emb_kernel(%arg0: i32, %arg1: memref<1xi32, #tpu.memory_space<smem>>, %arg2: memref<8x2x32xf32, #tpu.memory_space<vmem>>, %arg3: memref<8x1x32xf32, #tpu.memory_space<vmem>>, %arg4: memref<8x2x32xf32, #tpu.memory_space<vmem>>) attributes {dimension_semantics = [#tpu.dimension_semantics<parallel>], iteration_bounds = array<i64: 1>, scalar_prefetch = 1 : i64, scratch_operands = 0 : i64, tpu.core_type = #tpu.core_type<tc>, window_params = [{transform_indices = @transform_0, window_bounds = array<i64: 8, 2, 32>}, {transform_indices = @transform_1, window_bounds = array<i64: 8, 1, 32>}, {transform_indices = @transform_2, window_bounds = array<i64: 8, 2, 32>}]} {
    %c0 = arith.constant 0 : index
    %c0_0 = arith.constant 0 : index
    %c0_1 = arith.constant 0 : index
    %0 = vector.load %arg2[%c0, %c0_0, %c0_1] : memref<8x2x32xf32, #tpu.memory_space<vmem>>, vector<8x2x32xf32>
    %cst = arith.constant 5.65685415 : f32
    %1 = vector.broadcast %cst : f32 to vector<8x2x32xf32>
    %2 = arith.mulf %0, %1 : vector<8x2x32xf32>
    %c0_2 = arith.constant 0 : index
    %c0_3 = arith.constant 0 : index
    %c0_4 = arith.constant 0 : index
    %3 = vector.load %arg3[%c0_2, %c0_3, %c0_4] : memref<8x1x32xf32, #tpu.memory_space<vmem>>, vector<8x1x32xf32>
    %4 = vector.broadcast %3 : vector<8x1x32xf32> to vector<8x2x32xf32>
    %5 = arith.addf %2, %4 : vector<8x2x32xf32>
    %c0_5 = arith.constant 0 : index
    %c0_6 = arith.constant 0 : index
    %c0_7 = arith.constant 0 : index
    %6 = vector.load %arg4[%c0_5, %c0_6, %c0_7] : memref<8x2x32xf32, #tpu.memory_space<vmem>>, vector<8x2x32xf32>
    tpu.vector_store %arg4[%c0_5, %c0_6, %c0_7], %5 {strides = array<i32>} : memref<8x2x32xf32, #tpu.memory_space<vmem>>, vector<8x2x32xf32>,
    return
  }
  func.func @transform_0(%arg0: i32, %arg1: memref<1xi32, #tpu.memory_space<smem>>) -> (i32, i32, i32) {
    %c0_i32 = arith.constant 0 : i32
    %c0_i32_0 = arith.constant 0 : i32
    %c0_i32_1 = arith.constant 0 : i32
    return %arg0, %c0_i32, %c0_i32_0 : i32, i32, i32
  }
  func.func @transform_1(%arg0: i32, %arg1: memref<1xi32, #tpu.memory_space<smem>>) -> (i32, i32, i32) {
    %c0_i32 = arith.constant 0 : i32
    %c0_i32_0 = arith.constant 0 : i32
    %c0_i32_1 = arith.constant 0 : i32
    return %arg0, %c0_i32, %c0_i32_0 : i32, i32, i32
  }
  func.func @transform_2(%arg0: i32, %arg1: memref<1xi32, #tpu.memory_space<smem>>) -> (i32, i32, i32) {
    %c0_i32 = arith.constant 0 : i32
    %c0_i32_0 = arith.constant 0 : i32
    %c0_i32_1 = arith.constant 0 : i32
    return %arg0, %c0_i32, %c0_i32_0 : i32, i32, i32
  }
}

</mosaic_0001>

<llo_original>
// kernel: tpu_custom_call.1
$region0: #{tpu_custom_call.1}
  #allocation0 [shape = 'u32[]', space=smem, size = 0x4, offset = 0x4, fixed_abs, tag = 'smem constant byte address 0x4 - core index']
  #allocation1 [shape = 'u32[144,128]{1,0:T(1,128)}', space=vmem, size = 0x12000, scoped, tag = 'internal scratch']
  #allocation2 [shape = 's32[1]{0}', space=sflag, size = 0x4, scoped, tag = 'scoped memory for tpu_custom_call.1']
  #allocation3 [shape = 's32[1]{0:T(128)S(6)}', space=smem, size = 0x200, scoped, tag = 'prefetched SMEM operand 0']
  %s0 = inlined_call_operand.<no memory space> [shape: s32[1], index: 0, kind: input, shape index: {}]
  %s1 = inlined_call_operand.vmem [shape: f32[8,2,32], index: 1, kind: input, shape index: {}]
  %s2 = inlined_call_operand.vmem [shape: f32[64,1,32], index: 2, kind: input, shape index: {}]
  %s3 = inlined_call_operand.hbm [shape: f32[8,2,32], index: 3, kind: output, shape index: {}]
  %s4 = sld [smem:[#allocation0]]
  $region18: #{tpu_custom_call.1} parent=0
    _
  %s6 = ssub.s32 1, %s4
  %s7 = scalar_select 0, %s6, %s4
  %8 = sst [smem:[#allocation3]] %s0
  $region1: #{tpu_custom_call.1} parent=0
    #allocation4 [shape = 'u8[8192]{0}', space=vmem, size = 0x2000, scoped, tag = 'output window, operand 0, single buffered']
    #allocation5 [shape = 's32[1]{0}', space=sflag, size = 0x4, scoped, tag = 'scoped memory for tpu_custom_call.1']
    %9 = vsyncpa [#allocation5], 0
    // Predicated region
    $region2: #{tpu_custom_call.1} parent=1 // pred_check
      _
    $region3: #{tpu_custom_call.1} parent=1 // pred_check_branch
      %11 = sbr.rel (0) target = $region5
    $region4: #{tpu_custom_call.1} parent=1 // pred_region
      _
    $region5: #{tpu_custom_call.1} parent=1 // pred_fallthru
      _
    // Predicated region
    $region6: #{tpu_custom_call.1} parent=1 // pred_check
      _
    $region7: #{tpu_custom_call.1} parent=1 // pred_check_branch
      %13 = sbr.rel (0) target = $region9
    $region8: #{tpu_custom_call.1} parent=1 // pred_region
      _
    $region9: #{tpu_custom_call.1} parent=1 // pred_fallthru
      _
    %v14 = vld [vmem:[%s1] sm:$0x3]
    %v15 = vld [vmem:[%s1 + $0x2] sm:$0x3]
    %v16 = vld [vmem:[%s1 + $0x4] sm:$0x3]
    %v17 = vld [vmem:[%s1 + $0x6] sm:$0x3]
    %v18 = vld [vmem:[%s1 + $0x8] sm:$0x3]
    %v19 = vld [vmem:[%s1 + $0xa] sm:$0x3]
    %v20 = vld [vmem:[%s1 + $0xc] sm:$0x3]
    %v21 = vld [vmem:[%s1 + $0xe] sm:$0x3]
    %v22 = vmul.f32 %v14, 5.656854
    %v23 = vmul.f32 %v15, 5.656854
    %v24 = vmul.f32 %v16, 5.656854
    %v25 = vmul.f32 %v17, 5.656854
    %v26 = vmul.f32 %v18, 5.656854
    %v27 = vmul.f32 %v19, 5.656854
    %v28 = vmul.f32 %v20, 5.656854
    %v29 = vmul.f32 %v21, 5.656854
    %v30 = vld [vmem:[%s2] sm:$0x1]
    %v31 = vld [vmem:[%s2 + $0x1] sm:$0x1]
    %v32 = vld [vmem:[%s2 + $0x2] sm:$0x1]
    %v33 = vld [vmem:[%s2 + $0x3] sm:$0x1]
    %v34 = vld [vmem:[%s2 + $0x4] sm:$0x1]
    %v35 = vld [vmem:[%s2 + $0x5] sm:$0x1]
    %v36 = vld [vmem:[%s2 + $0x6] sm:$0x1]
    %v37 = vld [vmem:[%s2 + $0x7] sm:$0x1]
    %v46 = vlaneseq
    %v47 = vshrl.u32 %v46, 7
    %v48 = vsub.s32 0, %v47
    %v49 = vrot.slane %v30, %v48
    %v50 = vlaneseq
    %v51 = vshrl.u32 %v50, 7
    %v52 = vsub.s32 0, %v51
    %v53 = vrot.slane %v31, %v52
    %v54 = vlaneseq
    %v55 = vshrl.u32 %v54, 7
    %v56 = vsub.s32 0, %v55
    %v57 = vrot.slane %v32, %v56
    %v58 = vlaneseq
    %v59 = vshrl.u32 %v58, 7
    %v60 = vsub.s32 0, %v59
    %v61 = vrot.slane %v33, %v60
    %v62 = vlaneseq
    %v63 = vshrl.u32 %v62, 7
    %v64 = vsub.s32 0, %v63
    %v65 = vrot.slane %v34, %v64
    %v66 = vlaneseq
    %v67 = vshrl.u32 %v66, 7
    %v68 = vsub.s32 0, %v67
    %v69 = vrot.slane %v35, %v68
    %v70 = vlaneseq
    %v71 = vshrl.u32 %v70, 7
    %v72 = vsub.s32 0, %v71
    %v73 = vrot.slane %v36, %v72
    %v74 = vlaneseq
    %v75 = vshrl.u32 %v74, 7
    %v76 = vsub.s32 0, %v75
    %v77 = vrot.slane %v37, %v76
    %v86 = vadd.f32 %v22, %v49
    %v87 = vadd.f32 %v23, %v53
    %v88 = vadd.f32 %v24, %v57
    %v89 = vadd.f32 %v25, %v61
    %v90 = vadd.f32 %v26, %v65
    %v91 = vadd.f32 %v27, %v69
    %v92 = vadd.f32 %v28, %v73
    %v93 = vadd.f32 %v29, %v77
    %vm94 = vcmask 254976
    %95 = vst.msk [vmem:[#allocation4] sm:$0x3] %vm94, %v86
    %96 = vst.msk [vmem:[#allocation4 + $0x2] sm:$0x3] %vm94, %v87
    %97 = vst.msk [vmem:[#allocation4 + $0x4] sm:$0x3] %vm94, %v88
    %98 = vst.msk [vmem:[#allocation4 + $0x6] sm:$0x3] %vm94, %v89
    %99 = vst.msk [vmem:[#allocation4 + $0x8] sm:$0x3] %vm94, %v90
    %100 = vst.msk [vmem:[#allocation4 + $0xa] sm:$0x3] %vm94, %v91
    %101 = vst.msk [vmem:[#allocation4 + $0xc] sm:$0x3] %vm94, %v92
    %102 = vst.msk [vmem:[#allocation4 + $0xe] sm:$0x3] %vm94, %v93
    // Predicated region
    $region10: #{tpu_custom_call.1} parent=1 // pred_check
      _
    $region11: #{tpu_custom_call.1} parent=1 // pred_check_branch
      %104 = sbr.rel (0) target = $region13
    $region12: #{tpu_custom_call.1} parent=1 // pred_region
      %s106 = ssub.s32 256, 256
      %107 = vsyncadd [#allocation5], %s106
      %s108 = sshll.u32 [#allocation4], 4
      %s109 = int_to_ptr.vmem [resolvable:$true] %s108
      %114 = dma.vmem_to_hbm [thread:$0]  %s109, 256, %s3, [#allocation5], 32, 32, 2
    $region13: #{tpu_custom_call.1} parent=1 // pred_fallthru
      _
    // Predicated region
    $region14: #{tpu_custom_call.1} parent=1 // pred_check
      _
    $region15: #{tpu_custom_call.1} parent=1 // pred_check_branch
      %116 = sbr.rel (0) target = $region17
    $region16: #{tpu_custom_call.1} parent=1 // pred_region
      %117 = dma.done [#allocation5], 256
    $region17: #{tpu_custom_call.1} parent=1 // pred_fallthru
      _
    %118 = vsyncpa [#allocation5], 1

</llo_original>
